<compile_context>
chip_gen: v7x
topology: tpu7x:2x2x1
jax: 0.10.0
libtpu: 0.0.40
codegen_flags: <defaults>
</compile_context>

<pallas_src>
import functools

import jax
import jax.numpy as jnp
from jax.experimental import pallas as pl
from jax.experimental.pallas import tpu as pltpu


BN_EPS = 1e-5
LANES = 128


# --------------------------------------------------------------------------- #
# Kernel
# --------------------------------------------------------------------------- #
def _fused_conv_kernel(*refs, K, B, H, W, chans, use_bn, residual):
    """Fused [Conv(KxK, same) -> (BN) -> ReLU] x n_layers, all in VMEM.

    Ref layout (n = n_layers = len(chans) - 1, per = 4 if use_bn else 2):
      refs[0]                          : x      (B*H, W*chans[0])   row-dense f32
      refs[1+per*l : 1+per*(l+1)]      : per-layer
            if use_bn:
              w_struct (K*W*Ci, W*Co)  bf16  structured conv weights (kh,kw,Cin folded)
              gamma_l  (1, W*Co)       f32   BN gamma, lane-tiled
              beta_l   (1, W*Co)       f32   BN beta,  lane-tiled
              avg_mat  (W*Co, W*Co)    f32   lane -> per-channel-mean matrix (incl. 1/N)
            else:
              w_struct (K*W*Ci, W*Co)  bf16
              bias_l   (1, W*Co)       f32   conv bias, lane-tiled
      refs[1+per*n]                    : out    (B*H, W*chans[-1])  f32
      refs[2+per*n :]                  : per-layer VMEM pad scratch (B, H+2p, W*Ci) f32
    """
    n_layers = len(chans) - 1
    per = 4 if use_bn else 2
    p = K // 2

    x_ref = refs[0]
    out_ref = refs[1 + per * n_layers]
    pad_refs = refs[2 + per * n_layers:]

    y = x_ref[...]                                        # (B*H, W*chans[0]) f32

    for layer in range(n_layers):
        Ci = chans[layer]
        Co = chans[layer + 1]
        lrefs = refs[1 + per * layer: 1 + per * (layer + 1)]
        w_ref = lrefs[0]
        pad_ref = pad_refs[layer]                          # (B, H+2p, W*Ci)

        # ---- height zero-padding: zero ONLY the 2p halo rows, then interior ----
        if p > 0:
            halo = jnp.zeros((B, p, W * Ci), jnp.float32)
            pad_ref[:, :p, :] = halo
            pad_ref[:, p + H:, :] = halo
        pad_ref[:, p:p + H, :] = y.reshape(B, H, W * Ci)

        # ---- conv as ONE lane-dense GEMM (kh taps concatenated on lanes) ----
        lhs = jnp.concatenate(
            [pad_ref[:, kh:kh + H, :].reshape(B * H, W * Ci).astype(jnp.bfloat16)
             for kh in range(K)],
            axis=1)                                        # (B*H, K*W*Ci) bf16
        acc = jnp.dot(lhs, w_ref[...],
                      preferred_element_type=jnp.float32)  # (B*H, W*Co) f32

        if use_bn:
            # Conv bias omitted: a per-channel constant added before
            # training-mode BatchNorm is exactly cancelled by mean subtraction.
            gamma_ref, beta_ref, avg_ref = lrefs[1], lrefs[2], lrefs[3]
            lane_sum = jnp.sum(acc, axis=0, keepdims=True)           # (1, W*Co)
            lane_sqsum = jnp.sum(acc * acc, axis=0, keepdims=True)   # (1, W*Co)
            stats = jnp.dot(jnp.concatenate([lane_sum, lane_sqsum], axis=0),
                            avg_ref[...],
                            preferred_element_type=jnp.float32)      # (2, W*Co)
            mean_l = stats[0:1, :]                                   # E[x]
            var_l = stats[1:2, :] - mean_l * mean_l                  # E[x^2]-E[x]^2
            inv_std_l = jax.lax.rsqrt(var_l + BN_EPS)                # EUP slot
            scale_l = gamma_ref[...] * inv_std_l
            shift_l = beta_ref[...] - mean_l * scale_l
            y = jnp.maximum(acc * scale_l + shift_l, 0.0)            # one fused pass
        else:
            bias_ref = lrefs[1]
            y = jnp.maximum(acc + bias_ref[...], 0.0)

    if residual:
        y = y + x_ref[...]

    out_ref[...] = y                                       # full-lane f32 store


# --------------------------------------------------------------------------- #
# Wrapper-side parameter preparation
# --------------------------------------------------------------------------- #
def _pad_channels(c, W):
    """Smallest c' >= c such that W*c' is a multiple of 128 (lane density)."""
    cp = int(c)
    while (W * cp) % LANES != 0:
        cp += 1
    return cp


def _structured_weights(w_oihw, W, K):
    """Fold kh, kw and Cin of a KxK 'same' conv into a single GEMM matrix.

    Returns ws of shape (K*W*Cin, W*Cout) such that
      out_row[j*Cout + o] = sum_{kh,u,i} lhs[kh*W*Cin + u*Cin + i] * ws[..., j*Cout + o]
    where lhs block kh is the padded input row at height offset kh. Width zero
    padding is absorbed into the weight (gather + where, no precision loss).
    """
    Cout, Cin = int(w_oihw.shape[0]), int(w_oihw.shape[1])
    p = K // 2
    w_k = jnp.transpose(w_oihw, (2, 3, 1, 0)).astype(jnp.float32)   # (kh, kw, Cin, Cout)
    u = jnp.arange(W)[:, None]                # input pixel
    j = jnp.arange(W)[None, :]                # output pixel
    kw = u - j + p                            # tap index, (W, W)
    valid = (kw >= 0) & (kw < K)
    kw_c = jnp.clip(kw, 0, K - 1)
    gath = w_k[:, kw_c, :, :]                                      # (K, W, W, Cin, Cout)
    gath = jnp.where(valid[None, :, :, None, None], gath, 0.0)
    ws = jnp.transpose(gath, (0, 1, 3, 2, 4))                      # (kh, u, Cin, j, Cout)
    return ws.reshape(K * W * Cin, W * Cout)


def _tile_lane(v, W):
    """Per-channel (C,) vector -> lane-tiled (1, W*C) row."""
    return jnp.tile(v.astype(jnp.float32).reshape(1, -1), (1, W))


def _layer_inputs(w, b, gamma, beta, ci_p, co_p, *, W, K, B, H, use_bn):
    """Per-layer kernel inputs (channel-padded, bf16 weights, lane-tiled params)."""
    f32 = jnp.float32
    co_t, ci_t = int(w.shape[0]), int(w.shape[1])
    w_p = jnp.zeros((co_p, ci_p, K, K), f32).at[:co_t, :ci_t].set(w.astype(f32))
    ws = _structured_weights(w_p, W, K).astype(jnp.bfloat16)        # (K*W*ci_p, W*co_p)
    if use_bn:
        g_p = jnp.ones((co_p,), f32).at[:co_t].set(gamma.astype(f32))
        bt_p = jnp.zeros((co_p,), f32).at[:co_t].set(beta.astype(f32))
        # Channel-averaging matrix: lanes -> per-channel mean, broadcast back to
        # lanes, with 1/(B*H*W) folded in.  (fold @ unfold) == tile(eye, (W, W)).
        avg = jnp.tile(jnp.eye(co_p, dtype=f32), (W, W)) / float(B * H * W)
        return [ws, _tile_lane(g_p, W), _tile_lane(bt_p, W), avg]
    b_p = jnp.zeros((co_p,), f32).at[:co_t].set(b.astype(f32))
    return [ws, _tile_lane(b_p, W)]


def conv_forward(x_nchw, params, *, use_double_conv=True, k=3, use_bn=True,
                 residual=False):
    """Forward pass of the PyTorch `Conv` module (NCHW in, NCHW out)."""
    B, Cin, H, W = (int(s) for s in x_nchw.shape)
    layers = list(params) if use_double_conv else list(params[:1])
    chans_t = [Cin] + [int(w.shape[0]) for (w, _, _, _) in layers]
    n_layers = len(layers)
    p = k // 2

    apply_residual = bool(residual) and use_double_conv
    if apply_residual and chans_t[0] != chans_t[-1]:
        raise ValueError("residual=True requires in_channels == out_channels")

    # Lane-dense channel padding (zero channels; zero weight rows -> exact).
    chans = [_pad_channels(c, W) for c in chans_t]

    # NCHW -> row-dense (B*H, W*Cin_pad) layout (same memory order as NHWC).
    # TODO(synk): keep activations NHWC upstream for real sizes so this
    # transpose (a full HBM read+write of the activation) disappears.
    x_nhwc = jnp.transpose(x_nchw, (0, 2, 3, 1)).astype(jnp.float32)
    if chans[0] > Cin:
        x_nhwc = jnp.pad(x_nhwc, ((0, 0), (0, 0), (0, 0), (0, chans[0] - Cin)))
    x_rows = x_nhwc.reshape(B * H, W * chans[0])

    kernel_inputs = [x_rows]
    for li, (w, b, g, bt) in enumerate(layers):
        kernel_inputs.extend(_layer_inputs(
            w, b, g, bt, chans[li], chans[li + 1],
            W=W, K=k, B=B, H=H, use_bn=use_bn))

    kernel = functools.partial(
        _fused_conv_kernel, K=k, B=B, H=H, W=W, chans=tuple(chans),
        use_bn=use_bn, residual=apply_residual)

    # Advisory cost estimate so XLA can schedule around the custom call.
    flops = sum(2 * (B * H) * (k * W * chans[l]) * (W * chans[l + 1])
                for l in range(n_layers))
    transcendentals = sum(W * c for c in chans[1:]) if use_bn else 0
    bytes_accessed = sum(int(a.size) * a.dtype.itemsize for a in kernel_inputs)
    bytes_accessed += (B * H) * (W * chans[-1]) * 4
    cost = pl.CostEstimate(flops=int(flops), transcendentals=int(transcendentals),
                           bytes_accessed=int(bytes_accessed))

    out_rows = pl.pallas_call(
        kernel,
        out_shape=jax.ShapeDtypeStruct((B * H, W * chans[-1]), jnp.float32),
        in_specs=[pl.BlockSpec(memory_space=pltpu.MemorySpace.VMEM)]
        * len(kernel_inputs),
        out_specs=pl.BlockSpec(memory_space=pltpu.MemorySpace.VMEM),
        scratch_shapes=[
            pltpu.VMEM((B, H + 2 * p, W * c), jnp.float32) for c in chans[:-1]
        ],
        cost_estimate=cost,
    )(*kernel_inputs)

    out = out_rows.reshape(B, H, W, chans[-1])[..., :chans_t[-1]]
    return jnp.transpose(out, (0, 3, 1, 2))


# ----------------------- pure-JAX reference (for checking) ------------------ #
def ref_single(x_nchw, w_oihw, b, gamma, beta, *, k, use_bn=True):
    p = k // 2
    y = jax.lax.conv_general_dilated(
        x_nchw, w_oihw, window_strides=(1, 1), padding=[(p, p), (p, p)],
        dimension_numbers=("NCHW", "OIHW", "NCHW"),
    )
    y = y + b[None, :, None, None]
    if use_bn:
        mean = y.mean(axis=(0, 2, 3), keepdims=True)
        var = ((y - mean) ** 2).mean(axis=(0, 2, 3), keepdims=True)
        y = (y - mean) * jax.lax.rsqrt(var + BN_EPS)
        y = y * gamma[None, :, None, None] + beta[None, :, None, None]
    return jnp.maximum(y, 0.0)


def ref_forward(x_nchw, params, *, use_double_conv=True, k=3, use_bn=True,
                residual=False):
    res = x_nchw
    y = x_nchw
    layers = params if use_double_conv else params[:1]
    for (w, b, g, bt) in layers:
        y = ref_single(y, w, b, g, bt, k=k, use_bn=use_bn)
    if residual and use_double_conv:
        y = y + res
    return y


if __name__ == "__main__":
    key = jax.random.PRNGKey(0)

    # Conv(in_channels=4, out_channels=8, use_double_conv=True, kernel_size=3, use_bn=True)
    B, Cin, H, W = 2, 4, 16, 16
    Cmid, Cout, K = 8, 8, 3

    k_x, k_w1, k_b1, k_w2, k_b2 = jax.random.split(key, 5)
    x = jax.random.normal(k_x, (B, Cin, H, W), jnp.float32)

    w1 = 0.1 * jax.random.normal(k_w1, (Cmid, Cin, K, K), jnp.float32)   # OIHW
    b1 = 0.1 * jax.random.normal(k_b1, (Cmid,), jnp.float32)
    g1 = jnp.ones((Cmid,), jnp.float32)      # PyTorch BatchNorm2d default init
    bt1 = jnp.zeros((Cmid,), jnp.float32)

    w2 = 0.1 * jax.random.normal(k_w2, (Cout, Cmid, K, K), jnp.float32)  # OIHW
    b2 = 0.1 * jax.random.normal(k_b2, (Cout,), jnp.float32)
    g2 = jnp.ones((Cout,), jnp.float32)
    bt2 = jnp.zeros((Cout,), jnp.float32)

    params = [(w1, b1, g1, bt1), (w2, b2, g2, bt2)]

    # --- DoubleConv with BN (main path) --- bf16 MXU operands -> loose tol.
    out = conv_forward(x, params, use_double_conv=True, k=K, use_bn=True,
                       residual=False)
    out = jax.block_until_ready(out)
    ref = ref_forward(x, params, use_double_conv=True, k=K, use_bn=True,
                      residual=False)
    ref = jax.block_until_ready(ref)
    assert out.shape == (B, Cout, H, W), out.shape
    if not jnp.allclose(out, ref, atol=5e-2, rtol=5e-2):
        max_err = float(jnp.max(jnp.abs(out - ref)))
        raise AssertionError(
            f"DoubleConv(BN) mismatch vs reference (max abs err={max_err})")

    # --- SingleConv without BN (exercises the bias branch) ---
    out2 = conv_forward(x, params, use_double_conv=False, k=K, use_bn=False)
    out2 = jax.block_until_ready(out2)
    ref2 = ref_forward(x, params, use_double_conv=False, k=K, use_bn=False)
    ref2 = jax.block_until_ready(ref2)
    assert out2.shape == (B, Cmid, H, W), out2.shape
    if not jnp.allclose(out2, ref2, atol=2e-2, rtol=2e-2):
        max_err = float(jnp.max(jnp.abs(out2 - ref2)))
        raise AssertionError(
            f"SingleConv(no BN) mismatch vs reference (max abs err={max_err})")

    print("KERNEL_OK")
</pallas_src>

<mosaic_0001>
module attributes {stable_mosaic.version = 11 : i64} {
  func.func @_fused_conv_kernel(%arg0: memref<32x128xf32, #tpu.memory_space<vmem>>, %arg1: memref<384x128xbf16, #tpu.memory_space<vmem>>, %arg2: memref<1x128xf32, #tpu.memory_space<vmem>>, %arg3: memref<1x128xf32, #tpu.memory_space<vmem>>, %arg4: memref<128x128xf32, #tpu.memory_space<vmem>>, %arg5: memref<384x128xbf16, #tpu.memory_space<vmem>>, %arg6: memref<1x128xf32, #tpu.memory_space<vmem>>, %arg7: memref<1x128xf32, #tpu.memory_space<vmem>>, %arg8: memref<128x128xf32, #tpu.memory_space<vmem>>, %arg9: memref<32x128xf32, #tpu.memory_space<vmem>>, %arg10: memref<2x18x128xf32, #tpu.memory_space<vmem>>, %arg11: memref<2x18x128xf32, #tpu.memory_space<vmem>>) attributes {dimension_semantics = [], scalar_prefetch = 0 : i64, scratch_operands = 2 : i64, tpu.core_type = #tpu.core_type<tc>} {
    %c0 = arith.constant 0 : index
    %c0_0 = arith.constant 0 : index
    %0 = vector.load %arg0[%c0, %c0_0] : memref<32x128xf32, #tpu.memory_space<vmem>>, vector<32x128xf32>
    %cst = arith.constant 0.000000e+00 : f32
    %1 = vector.broadcast %cst : f32 to vector<2x1x128xf32>
    %c0_1 = arith.constant 0 : index
    %c0_2 = arith.constant 0 : index
    %c0_3 = arith.constant 0 : index
    %2 = vector.load %arg10[%c0_1, %c0_2, %c0_3] : memref<2x18x128xf32, #tpu.memory_space<vmem>>, vector<2x1x128xf32>
    tpu.vector_store %arg10[%c0_1, %c0_2, %c0_3], %1 {strides = array<i32>} : memref<2x18x128xf32, #tpu.memory_space<vmem>>, vector<2x1x128xf32>,
    %c0_4 = arith.constant 0 : index
    %c17 = arith.constant 17 : index
    %c0_5 = arith.constant 0 : index
    %3 = vector.load %arg10[%c0_4, %c17, %c0_5] : memref<2x18x128xf32, #tpu.memory_space<vmem>>, vector<2x1x128xf32>
    tpu.vector_store %arg10[%c0_4, %c17, %c0_5], %1 {strides = array<i32>} : memref<2x18x128xf32, #tpu.memory_space<vmem>>, vector<2x1x128xf32>,
    %4 = vector.shape_cast %0 : vector<32x128xf32> to vector<2x16x128xf32>
    %c0_6 = arith.constant 0 : index
    %c1 = arith.constant 1 : index
    %c0_7 = arith.constant 0 : index
    %5 = vector.load %arg10[%c0_6, %c1, %c0_7] : memref<2x18x128xf32, #tpu.memory_space<vmem>>, vector<2x16x128xf32>
    tpu.vector_store %arg10[%c0_6, %c1, %c0_7], %4 {strides = array<i32>} : memref<2x18x128xf32, #tpu.memory_space<vmem>>, vector<2x16x128xf32>,
    %c0_8 = arith.constant 0 : index
    %c0_9 = arith.constant 0 : index
    %c0_10 = arith.constant 0 : index
    %6 = vector.load %arg10[%c0_8, %c0_9, %c0_10] : memref<2x18x128xf32, #tpu.memory_space<vmem>>, vector<2x16x128xf32>
    %7 = vector.shape_cast %6 : vector<2x16x128xf32> to vector<32x128xf32>
    %8 = arith.truncf %7 : vector<32x128xf32> to vector<32x128xbf16>
    %c0_11 = arith.constant 0 : index
    %c1_12 = arith.constant 1 : index
    %c0_13 = arith.constant 0 : index
    %9 = vector.load %arg10[%c0_11, %c1_12, %c0_13] : memref<2x18x128xf32, #tpu.memory_space<vmem>>, vector<2x16x128xf32>
    %10 = vector.shape_cast %9 : vector<2x16x128xf32> to vector<32x128xf32>
    %11 = arith.truncf %10 : vector<32x128xf32> to vector<32x128xbf16>
    %c0_14 = arith.constant 0 : index
    %c2 = arith.constant 2 : index
    %c0_15 = arith.constant 0 : index
    %12 = vector.load %arg10[%c0_14, %c2, %c0_15] : memref<2x18x128xf32, #tpu.memory_space<vmem>>, vector<2x16x128xf32>
    %13 = vector.shape_cast %12 : vector<2x16x128xf32> to vector<32x128xf32>
    %14 = arith.truncf %13 : vector<32x128xf32> to vector<32x128xbf16>
    %15 = tpu.concatenate %8, %11, %14 in 1 : vector<32x128xbf16>, vector<32x128xbf16>, vector<32x128xbf16> -> vector<32x384xbf16>
    %c0_16 = arith.constant 0 : index
    %c0_17 = arith.constant 0 : index
    %16 = vector.load %arg1[%c0_16, %c0_17] : memref<384x128xbf16, #tpu.memory_space<vmem>>, vector<384x128xbf16>
    %cst_18 = arith.constant dense<0.000000e+00> : vector<32x128xf32>
    %17 = tpu.matmul %15, %16, %cst_18 {dimension_numbers = #tpu.dot_dimension_numbers<[1], [0], [0], [1], [0, 0, 1, 1], [], []>} : vector<32x384xbf16>, vector<384x128xbf16>, vector<32x128xf32> -> vector<32x128xf32>
    %cst_19 = arith.constant dense<0.000000e+00> : vector<128xf32>
    %18 = vector.multi_reduction <add>, %17, %cst_19 [0] : vector<32x128xf32> to vector<128xf32>
    %19 = vector.shape_cast %18 : vector<128xf32> to vector<1x128xf32>
    %20 = arith.mulf %17, %17 : vector<32x128xf32>
    %cst_20 = arith.constant dense<0.000000e+00> : vector<128xf32>
    %21 = vector.multi_reduction <add>, %20, %cst_20 [0] : vector<32x128xf32> to vector<128xf32>
    %22 = vector.shape_cast %21 : vector<128xf32> to vector<1x128xf32>
    %23 = tpu.concatenate %19, %22 in 0 : vector<1x128xf32>, vector<1x128xf32> -> vector<2x128xf32>
    %c0_21 = arith.constant 0 : index
    %c0_22 = arith.constant 0 : index
    %24 = vector.load %arg4[%c0_21, %c0_22] : memref<128x128xf32, #tpu.memory_space<vmem>>, vector<128x128xf32>
    %cst_23 = arith.constant dense<0.000000e+00> : vector<2x128xf32>
    %25 = tpu.matmul %23, %24, %cst_23 {dimension_numbers = #tpu.dot_dimension_numbers<[1], [0], [0], [1], [0, 0, 1, 1], [], []>} : vector<2x128xf32>, vector<128x128xf32>, vector<2x128xf32> -> vector<2x128xf32>
    %26 = vector.extract_strided_slice %25 {offsets = [0, 0], sizes = [1, 128], strides = [1, 1]} : vector<2x128xf32> to vector<1x128xf32>
    %27 = vector.extract_strided_slice %25 {offsets = [1, 0], sizes = [1, 128], strides = [1, 1]} : vector<2x128xf32> to vector<1x128xf32>
    %28 = arith.mulf %26, %26 : vector<1x128xf32>
    %29 = arith.subf %27, %28 : vector<1x128xf32>
    %cst_24 = arith.constant 9.99999974E-6 : f32
    %30 = vector.broadcast %cst_24 : f32 to vector<1x128xf32>
    %31 = arith.addf %29, %30 : vector<1x128xf32>
    %32 = math.rsqrt %31 : vector<1x128xf32>
    %c0_25 = arith.constant 0 : index
    %c0_26 = arith.constant 0 : index
    %33 = vector.load %arg2[%c0_25, %c0_26] : memref<1x128xf32, #tpu.memory_space<vmem>>, vector<1x128xf32>
    %34 = arith.mulf %33, %32 : vector<1x128xf32>
    %c0_27 = arith.constant 0 : index
    %c0_28 = arith.constant 0 : index
    %35 = vector.load %arg3[%c0_27, %c0_28] : memref<1x128xf32, #tpu.memory_space<vmem>>, vector<1x128xf32>
    %36 = arith.mulf %26, %34 : vector<1x128xf32>
    %37 = arith.subf %35, %36 : vector<1x128xf32>
    %38 = vector.broadcast %34 : vector<1x128xf32> to vector<32x128xf32>
    %39 = arith.mulf %17, %38 : vector<32x128xf32>
    %40 = vector.broadcast %37 : vector<1x128xf32> to vector<32x128xf32>
    %41 = arith.addf %39, %40 : vector<32x128xf32>
    %cst_29 = arith.constant 0.000000e+00 : f32
    %42 = vector.broadcast %cst_29 : f32 to vector<32x128xf32>
    %43 = arith.maximumf %41, %42 : vector<32x128xf32>
    %cst_30 = arith.constant 0.000000e+00 : f32
    %44 = vector.broadcast %cst_30 : f32 to vector<2x1x128xf32>
    %c0_31 = arith.constant 0 : index
    %c0_32 = arith.constant 0 : index
    %c0_33 = arith.constant 0 : index
    %45 = vector.load %arg11[%c0_31, %c0_32, %c0_33] : memref<2x18x128xf32, #tpu.memory_space<vmem>>, vector<2x1x128xf32>
    tpu.vector_store %arg11[%c0_31, %c0_32, %c0_33], %44 {strides = array<i32>} : memref<2x18x128xf32, #tpu.memory_space<vmem>>, vector<2x1x128xf32>,
    %c0_34 = arith.constant 0 : index
    %c17_35 = arith.constant 17 : index
    %c0_36 = arith.constant 0 : index
    %46 = vector.load %arg11[%c0_34, %c17_35, %c0_36] : memref<2x18x128xf32, #tpu.memory_space<vmem>>, vector<2x1x128xf32>
    tpu.vector_store %arg11[%c0_34, %c17_35, %c0_36], %44 {strides = array<i32>} : memref<2x18x128xf32, #tpu.memory_space<vmem>>, vector<2x1x128xf32>,
    %47 = vector.shape_cast %43 : vector<32x128xf32> to vector<2x16x128xf32>
    %c0_37 = arith.constant 0 : index
    %c1_38 = arith.constant 1 : index
    %c0_39 = arith.constant 0 : index
    %48 = vector.load %arg11[%c0_37, %c1_38, %c0_39] : memref<2x18x128xf32, #tpu.memory_space<vmem>>, vector<2x16x128xf32>
    tpu.vector_store %arg11[%c0_37, %c1_38, %c0_39], %47 {strides = array<i32>} : memref<2x18x128xf32, #tpu.memory_space<vmem>>, vector<2x16x128xf32>,
    %c0_40 = arith.constant 0 : index
    %c0_41 = arith.constant 0 : index
    %c0_42 = arith.constant 0 : index
    %49 = vector.load %arg11[%c0_40, %c0_41, %c0_42] : memref<2x18x128xf32, #tpu.memory_space<vmem>>, vector<2x16x128xf32>
    %50 = vector.shape_cast %49 : vector<2x16x128xf32> to vector<32x128xf32>
    %51 = arith.truncf %50 : vector<32x128xf32> to vector<32x128xbf16>
    %c0_43 = arith.constant 0 : index
    %c1_44 = arith.constant 1 : index
    %c0_45 = arith.constant 0 : index
    %52 = vector.load %arg11[%c0_43, %c1_44, %c0_45] : memref<2x18x128xf32, #tpu.memory_space<vmem>>, vector<2x16x128xf32>
    %53 = vector.shape_cast %52 : vector<2x16x128xf32> to vector<32x128xf32>
    %54 = arith.truncf %53 : vector<32x128xf32> to vector<32x128xbf16>
    %c0_46 = arith.constant 0 : index
    %c2_47 = arith.constant 2 : index
    %c0_48 = arith.constant 0 : index
    %55 = vector.load %arg11[%c0_46, %c2_47, %c0_48] : memref<2x18x128xf32, #tpu.memory_space<vmem>>, vector<2x16x128xf32>
    %56 = vector.shape_cast %55 : vector<2x16x128xf32> to vector<32x128xf32>
    %57 = arith.truncf %56 : vector<32x128xf32> to vector<32x128xbf16>
    %58 = tpu.concatenate %51, %54, %57 in 1 : vector<32x128xbf16>, vector<32x128xbf16>, vector<32x128xbf16> -> vector<32x384xbf16>
    %c0_49 = arith.constant 0 : index
    %c0_50 = arith.constant 0 : index
    %59 = vector.load %arg5[%c0_49, %c0_50] : memref<384x128xbf16, #tpu.memory_space<vmem>>, vector<384x128xbf16>
    %cst_51 = arith.constant dense<0.000000e+00> : vector<32x128xf32>
    %60 = tpu.matmul %58, %59, %cst_51 {dimension_numbers = #tpu.dot_dimension_numbers<[1], [0], [0], [1], [0, 0, 1, 1], [], []>} : vector<32x384xbf16>, vector<384x128xbf16>, vector<32x128xf32> -> vector<32x128xf32>
    %cst_52 = arith.constant dense<0.000000e+00> : vector<128xf32>
    %61 = vector.multi_reduction <add>, %60, %cst_52 [0] : vector<32x128xf32> to vector<128xf32>
    %62 = vector.shape_cast %61 : vector<128xf32> to vector<1x128xf32>
    %63 = arith.mulf %60, %60 : vector<32x128xf32>
    %cst_53 = arith.constant dense<0.000000e+00> : vector<128xf32>
    %64 = vector.multi_reduction <add>, %63, %cst_53 [0] : vector<32x128xf32> to vector<128xf32>
    %65 = vector.shape_cast %64 : vector<128xf32> to vector<1x128xf32>
    %66 = tpu.concatenate %62, %65 in 0 : vector<1x128xf32>, vector<1x128xf32> -> vector<2x128xf32>
    %c0_54 = arith.constant 0 : index
    %c0_55 = arith.constant 0 : index
    %67 = vector.load %arg8[%c0_54, %c0_55] : memref<128x128xf32, #tpu.memory_space<vmem>>, vector<128x128xf32>
    %cst_56 = arith.constant dense<0.000000e+00> : vector<2x128xf32>
    %68 = tpu.matmul %66, %67, %cst_56 {dimension_numbers = #tpu.dot_dimension_numbers<[1], [0], [0], [1], [0, 0, 1, 1], [], []>} : vector<2x128xf32>, vector<128x128xf32>, vector<2x128xf32> -> vector<2x128xf32>
    %69 = vector.extract_strided_slice %68 {offsets = [0, 0], sizes = [1, 128], strides = [1, 1]} : vector<2x128xf32> to vector<1x128xf32>
    %70 = vector.extract_strided_slice %68 {offsets = [1, 0], sizes = [1, 128], strides = [1, 1]} : vector<2x128xf32> to vector<1x128xf32>
    %71 = arith.mulf %69, %69 : vector<1x128xf32>
    %72 = arith.subf %70, %71 : vector<1x128xf32>
    %cst_57 = arith.constant 9.99999974E-6 : f32
    %73 = vector.broadcast %cst_57 : f32 to vector<1x128xf32>
    %74 = arith.addf %72, %73 : vector<1x128xf32>
    %75 = math.rsqrt %74 : vector<1x128xf32>
    %c0_58 = arith.constant 0 : index
    %c0_59 = arith.constant 0 : index
    %76 = vector.load %arg6[%c0_58, %c0_59] : memref<1x128xf32, #tpu.memory_space<vmem>>, vector<1x128xf32>
    %77 = arith.mulf %76, %75 : vector<1x128xf32>
    %c0_60 = arith.constant 0 : index
    %c0_61 = arith.constant 0 : index
    %78 = vector.load %arg7[%c0_60, %c0_61] : memref<1x128xf32, #tpu.memory_space<vmem>>, vector<1x128xf32>
    %79 = arith.mulf %69, %77 : vector<1x128xf32>
    %80 = arith.subf %78, %79 : vector<1x128xf32>
    %81 = vector.broadcast %77 : vector<1x128xf32> to vector<32x128xf32>
    %82 = arith.mulf %60, %81 : vector<32x128xf32>
    %83 = vector.broadcast %80 : vector<1x128xf32> to vector<32x128xf32>
    %84 = arith.addf %82, %83 : vector<32x128xf32>
    %cst_62 = arith.constant 0.000000e+00 : f32
    %85 = vector.broadcast %cst_62 : f32 to vector<32x128xf32>
    %86 = arith.maximumf %84, %85 : vector<32x128xf32>
    %c0_63 = arith.constant 0 : index
    %c0_64 = arith.constant 0 : index
    %87 = vector.load %arg9[%c0_63, %c0_64] : memref<32x128xf32, #tpu.memory_space<vmem>>, vector<32x128xf32>
    tpu.vector_store %arg9[%c0_63, %c0_64], %86 {strides = array<i32>} : memref<32x128xf32, #tpu.memory_space<vmem>>, vector<32x128xf32>,
    return
  }
}

</mosaic_0001>

<llo_original>
// kernel: tpu_custom_call.1
$region0: #{tpu_custom_call.1}
  #allocation0 [shape = 'u32[]', space=smem, size = 0x4, offset = 0x4, fixed_abs, tag = 'smem constant byte address 0x4 - core index']
  #allocation1 [shape = 'u32[144,128]{1,0:T(1,128)}', space=vmem, size = 0x12000, scoped, tag = 'internal scratch']
  #allocation2 [shape = 'f32[2,18,128]{2,1,0:T(8,128)}', space=vmem, size = 0x6000, scoped, tag = 'scratch operand']
  #allocation3 [shape = 'f32[2,18,128]{2,1,0:T(8,128)}', space=vmem, size = 0x6000, scoped, tag = 'scratch operand']
  %s0 = inlined_call_operand.hbm [shape: f32[32,128], index: 0, kind: input, shape index: {}]
  %s1 = inlined_call_operand.hbm [shape: bf16[384,128], index: 1, kind: input, shape index: {}]
  %s2 = inlined_call_operand.vmem [shape: f32[1,128], index: 2, kind: input, shape index: {}]
  %s3 = inlined_call_operand.vmem [shape: f32[1,128], index: 3, kind: input, shape index: {}]
  %s4 = inlined_call_operand.hbm [shape: f32[128,128], index: 4, kind: input, shape index: {}]
  %s5 = inlined_call_operand.hbm [shape: bf16[384,128], index: 5, kind: input, shape index: {}]
  %s6 = inlined_call_operand.vmem [shape: f32[1,128], index: 6, kind: input, shape index: {}]
  %s7 = inlined_call_operand.vmem [shape: f32[1,128], index: 7, kind: input, shape index: {}]
  %s8 = inlined_call_operand.hbm [shape: f32[128,128], index: 8, kind: input, shape index: {}]
  %s9 = inlined_call_operand.hbm [shape: f32[32,128], index: 9, kind: output, shape index: {}]
  %s10 = sld [smem:[#allocation0]]
  $region66: #{tpu_custom_call.1} parent=0
    _
  %s12 = ssub.s32 1, %s10
  %s13 = scalar_select 0, %s12, %s10
  $region1: #{tpu_custom_call.1} parent=0
    #allocation4 [shape = 'u8[16384]{0}', space=vmem, size = 0x4000, scoped, tag = 'input window, operand 0, single buffered']
    #allocation5 [shape = 's32[1]{0}', space=sflag, size = 0x4, scoped, tag = 'scoped memory for tpu_custom_call.1']
    #allocation6 [shape = 's32[1]{0}', space=sflag, size = 0x4, scoped, tag = 'scoped memory for tpu_custom_call.1']
    #allocation7 [shape = 'u8[98304]{0}', space=vmem, size = 0x18000, scoped, tag = 'input window, operand 1, single buffered']
    #allocation8 [shape = 's32[1]{0}', space=sflag, size = 0x4, scoped, tag = 'scoped memory for tpu_custom_call.1']
    #allocation9 [shape = 'u8[65536]{0}', space=vmem, size = 0x10000, scoped, tag = 'input window, operand 4, single buffered']
    #allocation10 [shape = 'u8[98304]{0}', space=vmem, size = 0x18000, scoped, tag = 'input window, operand 5, single buffered']
    #allocation11 [shape = 's32[1]{0}', space=sflag, size = 0x4, scoped, tag = 'scoped memory for tpu_custom_call.1']
    #allocation12 [shape = 'u8[65536]{0}', space=vmem, size = 0x10000, scoped, tag = 'input window, operand 8, single buffered']
    #allocation13 [shape = 'u8[16384]{0}', space=vmem, size = 0x4000, scoped, tag = 'output window, operand 0, single buffered']
    %14 = vsyncpa [#allocation5], 0
    %15 = vsyncpa [#allocation8], 0
    %16 = vsyncpa [#allocation11], 0
    %17 = vsyncpa [#allocation6], 0
    // Predicated region
    $region2: #{tpu_custom_call.1} parent=1 // pred_check
      _
    $region3: #{tpu_custom_call.1} parent=1 // pred_check_branch
      %19 = sbr.rel (0) target = $region5
    $region4: #{tpu_custom_call.1} parent=1 // pred_region
      %s21 = ssub.s32 512, 512
      %22 = vsyncadd [#allocation5], %s21
      %s23 = sshll.u32 [#allocation4], 4
      %s24 = int_to_ptr.vmem [resolvable:$true] %s23
      %29 = dma.hbm_to_vmem [thread:$0]  %s0, 512, %s24, [#allocation5], 128, 128, 8
    $region5: #{tpu_custom_call.1} parent=1 // pred_fallthru
      _
    // Predicated region
    $region6: #{tpu_custom_call.1} parent=1 // pred_check
      _
    $region7: #{tpu_custom_call.1} parent=1 // pred_check_branch
      %31 = sbr.rel (0) target = $region9
    $region8: #{tpu_custom_call.1} parent=1 // pred_region
      %s33 = ssub.s32 3072, 3072
      %34 = vsyncadd [#allocation8], %s33
      %s35 = sshll.u32 [#allocation7], 4
      %s36 = int_to_ptr.vmem [resolvable:$true] %s35
      %41 = dma.hbm_to_vmem [thread:$0]  %s1, 3072, %s36, [#allocation8], 64, 64, 4
    $region9: #{tpu_custom_call.1} parent=1 // pred_fallthru
      _
    // Predicated region
    $region10: #{tpu_custom_call.1} parent=1 // pred_check
      _
    $region11: #{tpu_custom_call.1} parent=1 // pred_check_branch
      %43 = sbr.rel (0) target = $region13
    $region12: #{tpu_custom_call.1} parent=1 // pred_region
      _
    $region13: #{tpu_custom_call.1} parent=1 // pred_fallthru
      _
    // Predicated region
    $region14: #{tpu_custom_call.1} parent=1 // pred_check
      _
    $region15: #{tpu_custom_call.1} parent=1 // pred_check_branch
      %45 = sbr.rel (0) target = $region17
    $region16: #{tpu_custom_call.1} parent=1 // pred_region
      _
    $region17: #{tpu_custom_call.1} parent=1 // pred_fallthru
      _
    // Predicated region
    $region18: #{tpu_custom_call.1} parent=1 // pred_check
      _
    $region19: #{tpu_custom_call.1} parent=1 // pred_check_branch
      %47 = sbr.rel (0) target = $region21
    $region20: #{tpu_custom_call.1} parent=1 // pred_region
      %s49 = ssub.s32 2048, 2048
      %50 = vsyncadd [#allocation8], %s49
      %s51 = sshll.u32 [#allocation9], 4
      %s52 = int_to_ptr.vmem [resolvable:$true] %s51
      %57 = dma.hbm_to_vmem [thread:$0]  %s4, 2048, %s52, [#allocation8], 128, 128, 8
    $region21: #{tpu_custom_call.1} parent=1 // pred_fallthru
      _
    // Predicated region
    $region22: #{tpu_custom_call.1} parent=1 // pred_check
      _
    $region23: #{tpu_custom_call.1} parent=1 // pred_check_branch
      %59 = sbr.rel (0) target = $region25
    $region24: #{tpu_custom_call.1} parent=1 // pred_region
      %s61 = ssub.s32 3072, 3072
      %62 = vsyncadd [#allocation11], %s61
      %s63 = sshll.u32 [#allocation10], 4
      %s64 = int_to_ptr.vmem [resolvable:$true] %s63
      %69 = dma.hbm_to_vmem [thread:$0]  %s5, 3072, %s64, [#allocation11], 64, 64, 4
    $region25: #{tpu_custom_call.1} parent=1 // pred_fallthru
      _
    // Predicated region
    $region26: #{tpu_custom_call.1} parent=1 // pred_check
      _
    $region27: #{tpu_custom_call.1} parent=1 // pred_check_branch
      %71 = sbr.rel (0) target = $region29
    $region28: #{tpu_custom_call.1} parent=1 // pred_region
      _
    $region29: #{tpu_custom_call.1} parent=1 // pred_fallthru
      _
    // Predicated region
    $region30: #{tpu_custom_call.1} parent=1 // pred_check
      _
    $region31: #{tpu_custom_call.1} parent=1 // pred_check_branch
      %73 = sbr.rel (0) target = $region33
    $region32: #{tpu_custom_call.1} parent=1 // pred_region
      _
    $region33: #{tpu_custom_call.1} parent=1 // pred_fallthru
      _
    // Predicated region
    $region34: #{tpu_custom_call.1} parent=1 // pred_check
      _
    $region35: #{tpu_custom_call.1} parent=1 // pred_check_branch
      %75 = sbr.rel (0) target = $region37
    $region36: #{tpu_custom_call.1} parent=1 // pred_region
      %s77 = ssub.s32 2048, 2048
      %78 = vsyncadd [#allocation11], %s77
      %s79 = sshll.u32 [#allocation12], 4
      %s80 = int_to_ptr.vmem [resolvable:$true] %s79
      %85 = dma.hbm_to_vmem [thread:$0]  %s8, 2048, %s80, [#allocation11], 128, 128, 8
    $region37: #{tpu_custom_call.1} parent=1 // pred_fallthru
      _
    // Predicated region
    $region38: #{tpu_custom_call.1} parent=1 // pred_check
      _
    $region39: #{tpu_custom_call.1} parent=1 // pred_check_branch
      %87 = sbr.rel (0) target = $region41
    $region40: #{tpu_custom_call.1} parent=1 // pred_region
      %88 = dma.done [#allocation5], 512
    $region41: #{tpu_custom_call.1} parent=1 // pred_fallthru
      _
    // Predicated region
    $region42: #{tpu_custom_call.1} parent=1 // pred_check
      _
    $region43: #{tpu_custom_call.1} parent=1 // pred_check_branch
      %90 = sbr.rel (0) target = $region45
    $region44: #{tpu_custom_call.1} parent=1 // pred_region
      %91 = dma.done [#allocation8], 3072
    $region45: #{tpu_custom_call.1} parent=1 // pred_fallthru
      _
    // Predicated region
    $region46: #{tpu_custom_call.1} parent=1 // pred_check
      _
    $region47: #{tpu_custom_call.1} parent=1 // pred_check_branch
      %93 = sbr.rel (0) target = $region49
    $region48: #{tpu_custom_call.1} parent=1 // pred_region
      %94 = dma.done [#allocation8], 2048
    $region49: #{tpu_custom_call.1} parent=1 // pred_fallthru
      _
    // Predicated region
    $region50: #{tpu_custom_call.1} parent=1 // pred_check
      _
    $region51: #{tpu_custom_call.1} parent=1 // pred_check_branch
      %96 = sbr.rel (0) target = $region53
    $region52: #{tpu_custom_call.1} parent=1 // pred_region
      %97 = dma.done [#allocation11], 3072
    $region53: #{tpu_custom_call.1} parent=1 // pred_fallthru
      _
    // Predicated region
    $region54: #{tpu_custom_call.1} parent=1 // pred_check
      _
    $region55: #{tpu_custom_call.1} parent=1 // pred_check_branch
      %99 = sbr.rel (0) target = $region57
    $region56: #{tpu_custom_call.1} parent=1 // pred_region
      %100 = dma.done [#allocation11], 2048
    $region57: #{tpu_custom_call.1} parent=1 // pred_fallthru
      _
    %v102 = vld [vmem:[#allocation4] sm:$0xff]
    %v103 = vld [vmem:[#allocation4 + $0x8] sm:$0xff]
    %v104 = vld [vmem:[#allocation4 + $0x10] sm:$0xff]
    %v105 = vld [vmem:[#allocation4 + $0x18] sm:$0xff]
    %106 = vst [vmem:[#allocation2] sm:$0x1] 0.0
    %107 = vst [vmem:[#allocation2 + $0x18] sm:$0x1] 0.0
    %108 = vst [vmem:[#allocation2 + $0x11] sm:$0x1] 0.0
    %109 = vst [vmem:[#allocation2 + $0x29] sm:$0x1] 0.0
    %110 = vst [vmem:[#allocation2 + $0x1] sm:$0xff] %v102
    %111 = vst [vmem:[#allocation2 + $0x9] sm:$0xff] %v103
    %112 = vst [vmem:[#allocation2 + $0x19] sm:$0xff] %v104
    %113 = vst [vmem:[#allocation2 + $0x21] sm:$0xff] %v105
    %v114 = vld [vmem:[#allocation2] sm:$0xff]
    %v115 = vld [vmem:[#allocation2 + $0x8] sm:$0xff]
    %v116 = vld [vmem:[#allocation2 + $0x18] sm:$0xff]
    %v117 = vld [vmem:[#allocation2 + $0x20] sm:$0xff]
    %v118 = vpack.c.bf16 %v115, %v114
    %v119 = vpack.c.bf16 %v117, %v116
    %v120 = vld [vmem:[#allocation2 + $0x1] sm:$0xff]
    %v121 = vld [vmem:[#allocation2 + $0x9] sm:$0xff]
    %v122 = vld [vmem:[#allocation2 + $0x19] sm:$0xff]
    %v123 = vld [vmem:[#allocation2 + $0x21] sm:$0xff]
    %v124 = vpack.c.bf16 %v121, %v120
    %v125 = vpack.c.bf16 %v123, %v122
    %v126 = vld [vmem:[#allocation2 + $0x2] sm:$0xff]
    %v127 = vld [vmem:[#allocation2 + $0xa] sm:$0xff]
    %v128 = vld [vmem:[#allocation2 + $0x1a] sm:$0xff]
    %v129 = vld [vmem:[#allocation2 + $0x22] sm:$0xff]
    %v130 = vpack.c.bf16 %v127, %v126
    %v131 = vpack.c.bf16 %v129, %v128
    %v132 = vld [vmem:[#allocation7] sm:$0xf]
    %v133 = vld [vmem:[#allocation7 + $0x4] sm:$0xf]
    %v134 = vld [vmem:[#allocation7 + $0x8] sm:$0xf]
    %v135 = vld [vmem:[#allocation7 + $0xc] sm:$0xf]
    %v136 = vld [vmem:[#allocation7 + $0x10] sm:$0xf]
    %v137 = vld [vmem:[#allocation7 + $0x14] sm:$0xf]
    %v138 = vld [vmem:[#allocation7 + $0x18] sm:$0xf]
    %v139 = vld [vmem:[#allocation7 + $0x1c] sm:$0xf]
    %v140 = vld [vmem:[#allocation7 + $0x20] sm:$0xf]
    %v141 = vld [vmem:[#allocation7 + $0x24] sm:$0xf]
    %v142 = vld [vmem:[#allocation7 + $0x28] sm:$0xf]
    %v143 = vld [vmem:[#allocation7 + $0x2c] sm:$0xf]
    %v144 = vld [vmem:[#allocation7 + $0x30] sm:$0xf]
    %v145 = vld [vmem:[#allocation7 + $0x34] sm:$0xf]
    %v146 = vld [vmem:[#allocation7 + $0x38] sm:$0xf]
    %v147 = vld [vmem:[#allocation7 + $0x3c] sm:$0xf]
    %v148 = vld [vmem:[#allocation7 + $0x40] sm:$0xf]
    %v149 = vld [vmem:[#allocation7 + $0x44] sm:$0xf]
    %v150 = vld [vmem:[#allocation7 + $0x48] sm:$0xf]
    %v151 = vld [vmem:[#allocation7 + $0x4c] sm:$0xf]
    %v152 = vld [vmem:[#allocation7 + $0x50] sm:$0xf]
    %v153 = vld [vmem:[#allocation7 + $0x54] sm:$0xf]
    %v154 = vld [vmem:[#allocation7 + $0x58] sm:$0xf]
    %v155 = vld [vmem:[#allocation7 + $0x5c] sm:$0xf]
    %v156 = vld [vmem:[#allocation7 + $0x60] sm:$0xf]
    %v157 = vld [vmem:[#allocation7 + $0x64] sm:$0xf]
    %v158 = vld [vmem:[#allocation7 + $0x68] sm:$0xf]
    %v159 = vld [vmem:[#allocation7 + $0x6c] sm:$0xf]
    %v160 = vld [vmem:[#allocation7 + $0x70] sm:$0xf]
    %v161 = vld [vmem:[#allocation7 + $0x74] sm:$0xf]
    %v162 = vld [vmem:[#allocation7 + $0x78] sm:$0xf]
    %v163 = vld [vmem:[#allocation7 + $0x7c] sm:$0xf]
    %v164 = vld [vmem:[#allocation7 + $0x80] sm:$0xf]
    %v165 = vld [vmem:[#allocation7 + $0x84] sm:$0xf]
    %v166 = vld [vmem:[#allocation7 + $0x88] sm:$0xf]
    %v167 = vld [vmem:[#allocation7 + $0x8c] sm:$0xf]
    %v168 = vld [vmem:[#allocation7 + $0x90] sm:$0xf]
    %v169 = vld [vmem:[#allocation7 + $0x94] sm:$0xf]
    %v170 = vld [vmem:[#allocation7 + $0x98] sm:$0xf]
    %v171 = vld [vmem:[#allocation7 + $0x9c] sm:$0xf]
    %v172 = vld [vmem:[#allocation7 + $0xa0] sm:$0xf]
    %v173 = vld [vmem:[#allocation7 + $0xa4] sm:$0xf]
    %v174 = vld [vmem:[#allocation7 + $0xa8] sm:$0xf]
    %v175 = vld [vmem:[#allocation7 + $0xac] sm:$0xf]
    %v176 = vld [vmem:[#allocation7 + $0xb0] sm:$0xf]
    %v177 = vld [vmem:[#allocation7 + $0xb4] sm:$0xf]
    %v178 = vld [vmem:[#allocation7 + $0xb8] sm:$0xf]
    %v179 = vld [vmem:[#allocation7 + $0xbc] sm:$0xf]
    %v228 = vunpack.c.l.b16 %v132
    %v229 = vunpack.c.l.b16 %v133
    %v230 = vunpack.c.l.b16 %v134
    %v231 = vunpack.c.l.b16 %v135
    %v232 = vunpack.c.l.b16 %v136
    %v233 = vunpack.c.l.b16 %v137
    %v234 = vunpack.c.l.b16 %v138
    %v235 = vunpack.c.l.b16 %v139
    %v236 = vunpack.c.l.b16 %v140
    %v237 = vunpack.c.l.b16 %v141
    %v238 = vunpack.c.l.b16 %v142
    %v239 = vunpack.c.l.b16 %v143
    %v240 = vunpack.c.l.b16 %v144
    %v241 = vunpack.c.l.b16 %v145
    %v242 = vunpack.c.l.b16 %v146
    %v243 = vunpack.c.l.b16 %v147
    %v244 = vunpack.c.l.b16 %v148
    %v245 = vunpack.c.l.b16 %v149
    %v246 = vunpack.c.l.b16 %v150
    %v247 = vunpack.c.l.b16 %v151
    %v248 = vunpack.c.l.b16 %v152
    %v249 = vunpack.c.l.b16 %v153
    %v250 = vunpack.c.l.b16 %v154
    %v251 = vunpack.c.l.b16 %v155
    %v252 = vunpack.c.l.b16 %v156
    %v253 = vunpack.c.l.b16 %v157
    %v254 = vunpack.c.l.b16 %v158
    %v255 = vunpack.c.l.b16 %v159
    %v256 = vunpack.c.l.b16 %v160
    %v257 = vunpack.c.l.b16 %v161
    %v258 = vunpack.c.l.b16 %v162
    %v259 = vunpack.c.l.b16 %v163
    %v260 = vunpack.c.l.b16 %v164
    %v261 = vunpack.c.l.b16 %v165
    %v262 = vunpack.c.l.b16 %v166
    %v263 = vunpack.c.l.b16 %v167
    %v264 = vunpack.c.l.b16 %v168
    %v265 = vunpack.c.l.b16 %v169
    %v266 = vunpack.c.l.b16 %v170
    %v267 = vunpack.c.l.b16 %v171
    %v268 = vunpack.c.l.b16 %v172
    %v269 = vunpack.c.l.b16 %v173
    %v270 = vunpack.c.l.b16 %v174
    %v271 = vunpack.c.l.b16 %v175
    %v272 = vunpack.c.l.b16 %v176
    %v273 = vunpack.c.l.b16 %v177
    %v274 = vunpack.c.l.b16 %v178
    %v275 = vunpack.c.l.b16 %v179
    %v276 = vpack.c.b16 %v229, %v228
    %v277 = vpack.c.b16 %v231, %v230
    %v278 = vpack.c.b16 %v233, %v232
    %v279 = vpack.c.b16 %v235, %v234
    %v280 = vpack.c.b16 %v237, %v236
    %v281 = vpack.c.b16 %v239, %v238
    %v282 = vpack.c.b16 %v241, %v240
    %v283 = vpack.c.b16 %v243, %v242
    %v284 = vpack.c.b16 %v245, %v244
    %v285 = vpack.c.b16 %v247, %v246
    %v286 = vpack.c.b16 %v249, %v248
    %v287 = vpack.c.b16 %v251, %v250
    %v288 = vpack.c.b16 %v253, %v252
    %v289 = vpack.c.b16 %v255, %v254
    %v290 = vpack.c.b16 %v257, %v256
    %v291 = vpack.c.b16 %v259, %v258
    %v292 = vpack.c.b16 %v261, %v260
    %v293 = vpack.c.b16 %v263, %v262
    %v294 = vpack.c.b16 %v265, %v264
    %v295 = vpack.c.b16 %v267, %v266
    %v296 = vpack.c.b16 %v269, %v268
    %v297 = vpack.c.b16 %v271, %v270
    %v298 = vpack.c.b16 %v273, %v272
    %v299 = vpack.c.b16 %v275, %v274
    %324 = vmatprep.subr.bf16.mxu0 0
    %325 = vmatpush1.bf16.msra.mxu0 %v276
    %326 = vmatprep.subr.bf16.mxu0 0
    %327 = vmatpush1.bf16.msra.mxu0 %v277
    %328 = vmatprep.subr.bf16.mxu0 0
    %329 = vmatpush1.bf16.msra.mxu0 %v278
    %330 = vmatprep.subr.bf16.mxu0 0
    %331 = vmatpush1.bf16.msra.mxu0 %v279
    %332 = vmatprep.subr.bf16.mxu0 0
    %333 = vmatpush1.bf16.msra.mxu0 %v280
    %334 = vmatprep.subr.bf16.mxu0 0
    %335 = vmatpush1.bf16.msra.mxu0 %v281
    %336 = vmatprep.subr.bf16.mxu0 0
    %337 = vmatpush1.bf16.msra.mxu0 %v282
    %338 = vmatprep.subr.bf16.mxu0 0
    %339 = vmatpush1.bf16.msra.mxu0 %v283
    %340 = vmatprep.subr.bf16.mxu0 0
    %341 = vmatpush1.bf16.msra.mxu0 %v284
    %342 = vmatprep.subr.bf16.mxu0 0
    %343 = vmatpush1.bf16.msra.mxu0 %v285
    %344 = vmatprep.subr.bf16.mxu0 0
    %345 = vmatpush1.bf16.msra.mxu0 %v286
    %346 = vmatprep.subr.bf16.mxu0 0
    %347 = vmatpush1.bf16.msra.mxu0 %v287
    %348 = vmatprep.subr.bf16.mxu0 0
    %349 = vmatpush1.bf16.msra.mxu0 %v288
    %350 = vmatprep.subr.bf16.mxu0 0
    %351 = vmatpush1.bf16.msra.mxu0 %v289
    %352 = vmatprep.subr.bf16.mxu0 0
    %353 = vmatpush1.bf16.msra.mxu0 %v290
    %354 = vmatprep.subr.bf16.mxu0 0
    %355 = vmatpush1.bf16.msra.mxu0 %v291
    %356 = vmatprep.mubr.bf16.mxu0 %v124
    %357 = vmatmul.mubr.bf16.gmra.mrb[0].mxu0 %v118
    %v358 = vpop.f32.mrb[0].mxu0
    %v359 = vadd.f32 0.0, %v358
    %v360 = vpop.f32.mrb[0].mxu0
    %v361 = vpop.f32.mrb[0].mxu0
    %v362 = vadd.f32 0.0, %v361
    %v363 = vpop.f32.mrb[0].mxu0
    %364 = vmatprep.mubr.bf16.mxu0 %v125
    %365 = vmatmul.mubr.bf16.gmra.mrb[0].mxu0 %v119
    %v366 = vpop.f32.mrb[0].mxu0
    %v367 = vadd.f32 0.0, %v366
    %v368 = vpop.f32.mrb[0].mxu0
    %v369 = vpop.f32.mrb[0].mxu0
    %v370 = vadd.f32 0.0, %v369
    %v371 = vpop.f32.mrb[0].mxu0
    %372 = vdwg.mxu0
    %373 = vmatprep.subr.bf16.mxu0 0
    %374 = vmatpush1.bf16.msra.mxu0 %v292
    %375 = vmatprep.subr.bf16.mxu0 0
    %376 = vmatpush1.bf16.msra.mxu0 %v293
    %377 = vmatprep.subr.bf16.mxu0 0
    %378 = vmatpush1.bf16.msra.mxu0 %v294
    %379 = vmatprep.subr.bf16.mxu0 0
    %380 = vmatpush1.bf16.msra.mxu0 %v295
    %381 = vmatprep.subr.bf16.mxu0 0
    %382 = vmatpush1.bf16.msra.mxu0 %v296
    %383 = vmatprep.subr.bf16.mxu0 0
    %384 = vmatpush1.bf16.msra.mxu0 %v297
    %385 = vmatprep.subr.bf16.mxu0 0
    %386 = vmatpush1.bf16.msra.mxu0 %v298
    %387 = vmatprep.subr.bf16.mxu0 0
    %388 = vmatpush1.bf16.msra.mxu0 %v299
    %389 = vmatprep.subr.bf16.mxu0 0
    %390 = vmatpush1.bf16.msra.mxu0 0
    %391 = vmatprep.subr.bf16.mxu0 0
    %392 = vmatpush1.bf16.msra.mxu0 0
    %393 = vmatprep.subr.bf16.mxu0 0
    %394 = vmatpush1.bf16.msra.mxu0 0
    %395 = vmatprep.subr.bf16.mxu0 0
    %396 = vmatpush1.bf16.msra.mxu0 0
    %397 = vmatprep.subr.bf16.mxu0 0
    %398 = vmatpush1.bf16.msra.mxu0 0
    %399 = vmatprep.subr.bf16.mxu0 0
    %400 = vmatpush1.bf16.msra.mxu0 0
    %401 = vmatprep.subr.bf16.mxu0 0
    %402 = vmatpush1.bf16.msra.mxu0 0
    %403 = vmatprep.subr.bf16.mxu0 0
    %404 = vmatpush1.bf16.msra.mxu0 0
    %405 = vmatprep.mubr.bf16.mxu0 0
    %406 = vmatmul.mubr.bf16.gmra.mrb[0].mxu0 %v130
    %v407 = vpop.f32.mrb[0].mxu0
    %v408 = vadd.f32 %v359, %v407
    %v409 = vpop.f32.mrb[0].mxu0
    %v410 = vpop.f32.mrb[0].mxu0
    %v411 = vadd.f32 %v362, %v410
    %v412 = vpop.f32.mrb[0].mxu0
    %413 = vmatprep.mubr.bf16.mxu0 0
    %414 = vmatmul.mubr.bf16.gmra.mrb[0].mxu0 %v131
    %v415 = vpop.f32.mrb[0].mxu0
    %v416 = vadd.f32 %v367, %v415
    %v417 = vpop.f32.mrb[0].mxu0
    %v418 = vpop.f32.mrb[0].mxu0
    %v419 = vadd.f32 %v370, %v418
    %v420 = vpop.f32.mrb[0].mxu0
    %421 = vdwg.mxu0
    %v422 = vadd.f32 %v408, %v411
    %v423 = vadd.f32 %v422, %v416
    %v424 = vadd.f32 %v423, %v419
    %v425 = vrot.slane %v424, 4
    %v426 = vadd.f32 %v424, %v425
    %v427 = vrot.slane %v426, 2
    %v428 = vadd.f32 %v426, %v427
    %v429 = vrot.slane %v428, 1
    %v430 = vadd.f32 %v428, %v429
    %v431 = vmul.f32 %v408, %v408
    %v432 = vmul.f32 %v411, %v411
    %v433 = vmul.f32 %v416, %v416
    %v434 = vmul.f32 %v419, %v419
    %v435 = vadd.f32 %v431, %v432
    %v436 = vadd.f32 %v435, %v433
    %v437 = vadd.f32 %v436, %v434
    %v438 = vrot.slane %v437, 4
    %v439 = vadd.f32 %v437, %v438
    %v440 = vrot.slane %v439, 2
    %v441 = vadd.f32 %v439, %v440
    %v442 = vrot.slane %v441, 1
    %v443 = vadd.f32 %v441, %v442
    %vm444 = vcmask 1040384
    %v445 = vsel %vm444, %v430, %v443
    %v446 = vld [vmem:[#allocation9] sm:$0xff]
    %v447 = vld [vmem:[#allocation9 + $0x8] sm:$0xff]
    %v448 = vld [vmem:[#allocation9 + $0x10] sm:$0xff]
    %v449 = vld [vmem:[#allocation9 + $0x18] sm:$0xff]
    %v450 = vld [vmem:[#allocation9 + $0x20] sm:$0xff]
    %v451 = vld [vmem:[#allocation9 + $0x28] sm:$0xff]
    %v452 = vld [vmem:[#allocation9 + $0x30] sm:$0xff]
    %v453 = vld [vmem:[#allocation9 + $0x38] sm:$0xff]
    %v454 = vld [vmem:[#allocation9 + $0x40] sm:$0xff]
    %v455 = vld [vmem:[#allocation9 + $0x48] sm:$0xff]
    %v456 = vld [vmem:[#allocation9 + $0x50] sm:$0xff]
    %v457 = vld [vmem:[#allocation9 + $0x58] sm:$0xff]
    %v458 = vld [vmem:[#allocation9 + $0x60] sm:$0xff]
    %v459 = vld [vmem:[#allocation9 + $0x68] sm:$0xff]
    %v460 = vld [vmem:[#allocation9 + $0x70] sm:$0xff]
    %v461 = vld [vmem:[#allocation9 + $0x78] sm:$0xff]
    %462 = vmatprep.subr.mxu0 0.0
    %463 = vmatpush1.msra.mxu0 %v446
    %464 = vmatprep.subr.mxu0 0.0
    %465 = vmatpush1.msra.mxu0 %v447
    %466 = vmatprep.subr.mxu0 0.0
    %467 = vmatpush1.msra.mxu0 %v448
    %468 = vmatprep.subr.mxu0 0.0
    %469 = vmatpush1.msra.mxu0 %v449
    %470 = vmatprep.subr.mxu0 0.0
    %471 = vmatpush1.msra.mxu0 %v450
    %472 = vmatprep.subr.mxu0 0.0
    %473 = vmatpush1.msra.mxu0 %v451
    %474 = vmatprep.subr.mxu0 0.0
    %475 = vmatpush1.msra.mxu0 %v452
    %476 = vmatprep.subr.mxu0 0.0
    %477 = vmatpush1.msra.mxu0 %v453
    %478 = vmatprep.subr.mxu0 0.0
    %479 = vmatpush1.msra.mxu0 %v454
    %480 = vmatprep.subr.mxu0 0.0
    %481 = vmatpush1.msra.mxu0 %v455
    %482 = vmatprep.subr.mxu0 0.0
    %483 = vmatpush1.msra.mxu0 %v456
    %484 = vmatprep.subr.mxu0 0.0
    %485 = vmatpush1.msra.mxu0 %v457
    %486 = vmatprep.subr.mxu0 0.0
    %487 = vmatpush1.msra.mxu0 %v458
    %488 = vmatprep.subr.mxu0 0.0
    %489 = vmatpush1.msra.mxu0 %v459
    %490 = vmatprep.subr.mxu0 0.0
    %491 = vmatpush1.msra.mxu0 %v460
    %492 = vmatprep.subr.mxu0 0.0
    %493 = vmatpush1.msra.mxu0 %v461
    %494 = vmatprep.subr.mxu0 0.0
    %495 = vmatpush1.msra.mxu0 0.0
    %496 = vmatprep.subr.mxu0 0.0
    %497 = vmatpush1.msra.mxu0 0.0
    %498 = vmatprep.subr.mxu0 0.0
    %499 = vmatpush1.msra.mxu0 0.0
    %500 = vmatprep.subr.mxu0 0.0
    %501 = vmatpush1.msra.mxu0 0.0
    %502 = vmatprep.subr.mxu0 0.0
    %503 = vmatpush1.msra.mxu0 0.0
    %504 = vmatprep.subr.mxu0 0.0
    %505 = vmatpush1.msra.mxu0 0.0
    %506 = vmatprep.subr.mxu0 0.0
    %507 = vmatpush1.msra.mxu0 0.0
    %508 = vmatprep.subr.mxu0 0.0
    %509 = vmatpush1.msra.mxu0 0.0
    %510 = vmatprep.subr.mxu0 0.0
    %511 = vmatpush1.msra.mxu0 0.0
    %512 = vmatprep.subr.mxu0 0.0
    %513 = vmatpush1.msra.mxu0 0.0
    %514 = vmatprep.subr.mxu0 0.0
    %515 = vmatpush1.msra.mxu0 0.0
    %516 = vmatprep.subr.mxu0 0.0
    %517 = vmatpush1.msra.mxu0 0.0
    %518 = vmatprep.subr.mxu0 0.0
    %519 = vmatpush1.msra.mxu0 0.0
    %520 = vmatprep.subr.mxu0 0.0
    %521 = vmatpush1.msra.mxu0 0.0
    %522 = vmatprep.subr.mxu0 0.0
    %523 = vmatpush1.msra.mxu0 0.0
    %524 = vmatprep.subr.mxu0 0.0
    %525 = vmatpush1.msra.mxu0 0.0
    %526 = vmatprep.mubr.f32.mxu0 0.0
    %527 = vmatmul.mubr.f32.gmra.mrb[0].mxu0 %v445
    %v528 = vpop.f32.mrb[0].mxu0
    %v529 = vadd.f32 0.0, %v528
    %v530 = vpop.f32.mrb[0].mxu0
    %531 = vdwg.mxu0
    %v532 = vmul.f32 %v529, %v529
    %v534 = vrot.slane %v532, 7
    %v536 = vsub.f32 %v529, %v534
    %v537 = vadd.f32 %v536, 1e-05
    %v538 = vrsqrt.pop %v537
    %v539 = vld [vmem:[%s2] sm:$0x1]
    %v542 = vunpack.c.l.s4 1966171168
    %v543 = vunpack.c.0.s8 %v542
    %v544 = vlaneseq
    %v545 = vshrl.u32 %v544, 7
    %v546 = vsub.s32 %v543, %v545
    %v547 = vrot.slane %v538, %v546
    %v548 = vcombine.high %v547, %v547
    %v550 = vunpack.c.l.s4 1966171168
    %v551 = vunpack.c.0.s8 %v550
    %v552 = vlaneseq
    %v553 = vshrl.u32 %v552, 7
    %v554 = vsub.s32 %v551, %v553
    %v555 = vrot.slane %v548, %v554
    %v557 = vmul.f32 %v539, %v555
    %v558 = vld [vmem:[%s3] sm:$0x1]
    %v559 = vmul.f32 %v529, %v557
    %v560 = vsub.f32 %v558, %v559
    %v562 = vlaneseq
    %v563 = vshrl.u32 %v562, 7
    %v564 = vsub.s32 0, %v563
    %v565 = vrot.slane %v557, %v564
    %v567 = vmul.f32 %v408, %v565
    %v568 = vmul.f32 %v411, %v565
    %v569 = vmul.f32 %v416, %v565
    %v570 = vmul.f32 %v419, %v565
    %v572 = vlaneseq
    %v573 = vshrl.u32 %v572, 7
    %v574 = vsub.s32 0, %v573
    %v575 = vrot.slane %v560, %v574
    %v577 = vadd.f32 %v567, %v575
    %v578 = vadd.f32 %v568, %v575
    %v579 = vadd.f32 %v569, %v575
    %v580 = vadd.f32 %v570, %v575
    %v581 = vmax.f32 %v577, 0.0
    %v582 = vmax.f32 %v578, 0.0
    %v583 = vmax.f32 %v579, 0.0
    %v584 = vmax.f32 %v580, 0.0
    %585 = vst [vmem:[#allocation3] sm:$0x1] 0.0
    %586 = vst [vmem:[#allocation3 + $0x18] sm:$0x1] 0.0
    %587 = vst [vmem:[#allocation3 + $0x11] sm:$0x1] 0.0
    %588 = vst [vmem:[#allocation3 + $0x29] sm:$0x1] 0.0
    %589 = vst [vmem:[#allocation3 + $0x1] sm:$0xff] %v581
    %590 = vst [vmem:[#allocation3 + $0x9] sm:$0xff] %v582
    %591 = vst [vmem:[#allocation3 + $0x19] sm:$0xff] %v583
    %592 = vst [vmem:[#allocation3 + $0x21] sm:$0xff] %v584
    %v593 = vld [vmem:[#allocation3] sm:$0xff]
    %v594 = vld [vmem:[#allocation3 + $0x8] sm:$0xff]
    %v595 = vld [vmem:[#allocation3 + $0x18] sm:$0xff]
    %v596 = vld [vmem:[#allocation3 + $0x20] sm:$0xff]
    %v597 = vpack.c.bf16 %v594, %v593
    %v598 = vpack.c.bf16 %v596, %v595
    %v599 = vld [vmem:[#allocation3 + $0x1] sm:$0xff]
    %v600 = vld [vmem:[#allocation3 + $0x9] sm:$0xff]
    %v601 = vld [vmem:[#allocation3 + $0x19] sm:$0xff]
    %v602 = vld [vmem:[#allocation3 + $0x21] sm:$0xff]
    %v603 = vpack.c.bf16 %v600, %v599
    %v604 = vpack.c.bf16 %v602, %v601
    %v605 = vld [vmem:[#allocation3 + $0x2] sm:$0xff]
    %v606 = vld [vmem:[#allocation3 + $0xa] sm:$0xff]
    %v607 = vld [vmem:[#allocation3 + $0x1a] sm:$0xff]
    %v608 = vld [vmem:[#allocation3 + $0x22] sm:$0xff]
    %v609 = vpack.c.bf16 %v606, %v605
    %v610 = vpack.c.bf16 %v608, %v607
    %v611 = vld [vmem:[#allocation10] sm:$0xf]
    %v612 = vld [vmem:[#allocation10 + $0x4] sm:$0xf]
    %v613 = vld [vmem:[#allocation10 + $0x8] sm:$0xf]
    %v614 = vld [vmem:[#allocation10 + $0xc] sm:$0xf]
    %v615 = vld [vmem:[#allocation10 + $0x10] sm:$0xf]
    %v616 = vld [vmem:[#allocation10 + $0x14] sm:$0xf]
    %v617 = vld [vmem:[#allocation10 + $0x18] sm:$0xf]
    %v618 = vld [vmem:[#allocation10 + $0x1c] sm:$0xf]
    %v619 = vld [vmem:[#allocation10 + $0x20] sm:$0xf]
    %v620 = vld [vmem:[#allocation10 + $0x24] sm:$0xf]
    %v621 = vld [vmem:[#allocation10 + $0x28] sm:$0xf]
    %v622 = vld [vmem:[#allocation10 + $0x2c] sm:$0xf]
    %v623 = vld [vmem:[#allocation10 + $0x30] sm:$0xf]
    %v624 = vld [vmem:[#allocation10 + $0x34] sm:$0xf]
    %v625 = vld [vmem:[#allocation10 + $0x38] sm:$0xf]
    %v626 = vld [vmem:[#allocation10 + $0x3c] sm:$0xf]
    %v627 = vld [vmem:[#allocation10 + $0x40] sm:$0xf]
    %v628 = vld [vmem:[#allocation10 + $0x44] sm:$0xf]
    %v629 = vld [vmem:[#allocation10 + $0x48] sm:$0xf]
    %v630 = vld [vmem:[#allocation10 + $0x4c] sm:$0xf]
    %v631 = vld [vmem:[#allocation10 + $0x50] sm:$0xf]
    %v632 = vld [vmem:[#allocation10 + $0x54] sm:$0xf]
    %v633 = vld [vmem:[#allocation10 + $0x58] sm:$0xf]
    %v634 = vld [vmem:[#allocation10 + $0x5c] sm:$0xf]
    %v635 = vld [vmem:[#allocation10 + $0x60] sm:$0xf]
    %v636 = vld [vmem:[#allocation10 + $0x64] sm:$0xf]
    %v637 = vld [vmem:[#allocation10 + $0x68] sm:$0xf]
    %v638 = vld [vmem:[#allocation10 + $0x6c] sm:$0xf]
    %v639 = vld [vmem:[#allocation10 + $0x70] sm:$0xf]
    %v640 = vld [vmem:[#allocation10 + $0x74] sm:$0xf]
    %v641 = vld [vmem:[#allocation10 + $0x78] sm:$0xf]
    %v642 = vld [vmem:[#allocation10 + $0x7c] sm:$0xf]
    %v643 = vld [vmem:[#allocation10 + $0x80] sm:$0xf]
    %v644 = vld [vmem:[#allocation10 + $0x84] sm:$0xf]
    %v645 = vld [vmem:[#allocation10 + $0x88] sm:$0xf]
    %v646 = vld [vmem:[#allocation10 + $0x8c] sm:$0xf]
    %v647 = vld [vmem:[#allocation10 + $0x90] sm:$0xf]
    %v648 = vld [vmem:[#allocation10 + $0x94] sm:$0xf]
    %v649 = vld [vmem:[#allocation10 + $0x98] sm:$0xf]
    %v650 = vld [vmem:[#allocation10 + $0x9c] sm:$0xf]
    %v651 = vld [vmem:[#allocation10 + $0xa0] sm:$0xf]
    %v652 = vld [vmem:[#allocation10 + $0xa4] sm:$0xf]
    %v653 = vld [vmem:[#allocation10 + $0xa8] sm:$0xf]
    %v654 = vld [vmem:[#allocation10 + $0xac] sm:$0xf]
    %v655 = vld [vmem:[#allocation10 + $0xb0] sm:$0xf]
    %v656 = vld [vmem:[#allocation10 + $0xb4] sm:$0xf]
    %v657 = vld [vmem:[#allocation10 + $0xb8] sm:$0xf]
    %v658 = vld [vmem:[#allocation10 + $0xbc] sm:$0xf]
    %v707 = vunpack.c.l.b16 %v611
    %v708 = vunpack.c.l.b16 %v612
    %v709 = vunpack.c.l.b16 %v613
    %v710 = vunpack.c.l.b16 %v614
    %v711 = vunpack.c.l.b16 %v615
    %v712 = vunpack.c.l.b16 %v616
    %v713 = vunpack.c.l.b16 %v617
    %v714 = vunpack.c.l.b16 %v618
    %v715 = vunpack.c.l.b16 %v619
    %v716 = vunpack.c.l.b16 %v620
    %v717 = vunpack.c.l.b16 %v621
    %v718 = vunpack.c.l.b16 %v622
    %v719 = vunpack.c.l.b16 %v623
    %v720 = vunpack.c.l.b16 %v624
    %v721 = vunpack.c.l.b16 %v625
    %v722 = vunpack.c.l.b16 %v626
    %v723 = vunpack.c.l.b16 %v627
    %v724 = vunpack.c.l.b16 %v628
    %v725 = vunpack.c.l.b16 %v629
    %v726 = vunpack.c.l.b16 %v630
    %v727 = vunpack.c.l.b16 %v631
    %v728 = vunpack.c.l.b16 %v632
    %v729 = vunpack.c.l.b16 %v633
    %v730 = vunpack.c.l.b16 %v634
    %v731 = vunpack.c.l.b16 %v635
    %v732 = vunpack.c.l.b16 %v636
    %v733 = vunpack.c.l.b16 %v637
    %v734 = vunpack.c.l.b16 %v638
    %v735 = vunpack.c.l.b16 %v639
    %v736 = vunpack.c.l.b16 %v640
    %v737 = vunpack.c.l.b16 %v641
    %v738 = vunpack.c.l.b16 %v642
    %v739 = vunpack.c.l.b16 %v643
    %v740 = vunpack.c.l.b16 %v644
    %v741 = vunpack.c.l.b16 %v645
    %v742 = vunpack.c.l.b16 %v646
    %v743 = vunpack.c.l.b16 %v647
    %v744 = vunpack.c.l.b16 %v648
    %v745 = vunpack.c.l.b16 %v649
    %v746 = vunpack.c.l.b16 %v650
    %v747 = vunpack.c.l.b16 %v651
    %v748 = vunpack.c.l.b16 %v652
    %v749 = vunpack.c.l.b16 %v653
    %v750 = vunpack.c.l.b16 %v654
    %v751 = vunpack.c.l.b16 %v655
    %v752 = vunpack.c.l.b16 %v656
    %v753 = vunpack.c.l.b16 %v657
    %v754 = vunpack.c.l.b16 %v658
    %v755 = vpack.c.b16 %v708, %v707
    %v756 = vpack.c.b16 %v710, %v709
    %v757 = vpack.c.b16 %v712, %v711
    %v758 = vpack.c.b16 %v714, %v713
    %v759 = vpack.c.b16 %v716, %v715
    %v760 = vpack.c.b16 %v718, %v717
    %v761 = vpack.c.b16 %v720, %v719
    %v762 = vpack.c.b16 %v722, %v721
    %v763 = vpack.c.b16 %v724, %v723
    %v764 = vpack.c.b16 %v726, %v725
    %v765 = vpack.c.b16 %v728, %v727
    %v766 = vpack.c.b16 %v730, %v729
    %v767 = vpack.c.b16 %v732, %v731
    %v768 = vpack.c.b16 %v734, %v733
    %v769 = vpack.c.b16 %v736, %v735
    %v770 = vpack.c.b16 %v738, %v737
    %v771 = vpack.c.b16 %v740, %v739
    %v772 = vpack.c.b16 %v742, %v741
    %v773 = vpack.c.b16 %v744, %v743
    %v774 = vpack.c.b16 %v746, %v745
    %v775 = vpack.c.b16 %v748, %v747
    %v776 = vpack.c.b16 %v750, %v749
    %v777 = vpack.c.b16 %v752, %v751
    %v778 = vpack.c.b16 %v754, %v753
    %803 = vmatprep.subr.bf16.mxu0 0
    %804 = vmatpush1.bf16.msra.mxu0 %v755
    %805 = vmatprep.subr.bf16.mxu0 0
    %806 = vmatpush1.bf16.msra.mxu0 %v756
    %807 = vmatprep.subr.bf16.mxu0 0
    %808 = vmatpush1.bf16.msra.mxu0 %v757
    %809 = vmatprep.subr.bf16.mxu0 0
    %810 = vmatpush1.bf16.msra.mxu0 %v758
    %811 = vmatprep.subr.bf16.mxu0 0
    %812 = vmatpush1.bf16.msra.mxu0 %v759
    %813 = vmatprep.subr.bf16.mxu0 0
    %814 = vmatpush1.bf16.msra.mxu0 %v760
    %815 = vmatprep.subr.bf16.mxu0 0
    %816 = vmatpush1.bf16.msra.mxu0 %v761
    %817 = vmatprep.subr.bf16.mxu0 0
    %818 = vmatpush1.bf16.msra.mxu0 %v762
    %819 = vmatprep.subr.bf16.mxu0 0
    %820 = vmatpush1.bf16.msra.mxu0 %v763
    %821 = vmatprep.subr.bf16.mxu0 0
    %822 = vmatpush1.bf16.msra.mxu0 %v764
    %823 = vmatprep.subr.bf16.mxu0 0
    %824 = vmatpush1.bf16.msra.mxu0 %v765
    %825 = vmatprep.subr.bf16.mxu0 0
    %826 = vmatpush1.bf16.msra.mxu0 %v766
    %827 = vmatprep.subr.bf16.mxu0 0
    %828 = vmatpush1.bf16.msra.mxu0 %v767
    %829 = vmatprep.subr.bf16.mxu0 0
    %830 = vmatpush1.bf16.msra.mxu0 %v768
    %831 = vmatprep.subr.bf16.mxu0 0
    %832 = vmatpush1.bf16.msra.mxu0 %v769
    %833 = vmatprep.subr.bf16.mxu0 0
    %834 = vmatpush1.bf16.msra.mxu0 %v770
    %835 = vmatprep.mubr.bf16.mxu0 %v603
    %836 = vmatmul.mubr.bf16.gmra.mrb[0].mxu0 %v597
    %v837 = vpop.f32.mrb[0].mxu0
    %v838 = vadd.f32 0.0, %v837
    %v839 = vpop.f32.mrb[0].mxu0
    %v840 = vpop.f32.mrb[0].mxu0
    %v841 = vadd.f32 0.0, %v840
    %v842 = vpop.f32.mrb[0].mxu0
    %843 = vmatprep.mubr.bf16.mxu0 %v604
    %844 = vmatmul.mubr.bf16.gmra.mrb[0].mxu0 %v598
    %v845 = vpop.f32.mrb[0].mxu0
    %v846 = vadd.f32 0.0, %v845
    %v847 = vpop.f32.mrb[0].mxu0
    %v848 = vpop.f32.mrb[0].mxu0
    %v849 = vadd.f32 0.0, %v848
    %v850 = vpop.f32.mrb[0].mxu0
    %851 = vdwg.mxu0
    %852 = vmatprep.subr.bf16.mxu0 0
    %853 = vmatpush1.bf16.msra.mxu0 %v771
    %854 = vmatprep.subr.bf16.mxu0 0
    %855 = vmatpush1.bf16.msra.mxu0 %v772
    %856 = vmatprep.subr.bf16.mxu0 0
    %857 = vmatpush1.bf16.msra.mxu0 %v773
    %858 = vmatprep.subr.bf16.mxu0 0
    %859 = vmatpush1.bf16.msra.mxu0 %v774
    %860 = vmatprep.subr.bf16.mxu0 0
    %861 = vmatpush1.bf16.msra.mxu0 %v775
    %862 = vmatprep.subr.bf16.mxu0 0
    %863 = vmatpush1.bf16.msra.mxu0 %v776
    %864 = vmatprep.subr.bf16.mxu0 0
    %865 = vmatpush1.bf16.msra.mxu0 %v777
    %866 = vmatprep.subr.bf16.mxu0 0
    %867 = vmatpush1.bf16.msra.mxu0 %v778
    %868 = vmatprep.subr.bf16.mxu0 0
    %869 = vmatpush1.bf16.msra.mxu0 0
    %870 = vmatprep.subr.bf16.mxu0 0
    %871 = vmatpush1.bf16.msra.mxu0 0
    %872 = vmatprep.subr.bf16.mxu0 0
    %873 = vmatpush1.bf16.msra.mxu0 0
    %874 = vmatprep.subr.bf16.mxu0 0
    %875 = vmatpush1.bf16.msra.mxu0 0
    %876 = vmatprep.subr.bf16.mxu0 0
    %877 = vmatpush1.bf16.msra.mxu0 0
    %878 = vmatprep.subr.bf16.mxu0 0
    %879 = vmatpush1.bf16.msra.mxu0 0
    %880 = vmatprep.subr.bf16.mxu0 0
    %881 = vmatpush1.bf16.msra.mxu0 0
    %882 = vmatprep.subr.bf16.mxu0 0
    %883 = vmatpush1.bf16.msra.mxu0 0
    %884 = vmatprep.mubr.bf16.mxu0 0
    %885 = vmatmul.mubr.bf16.gmra.mrb[0].mxu0 %v609
    %v886 = vpop.f32.mrb[0].mxu0
    %v887 = vadd.f32 %v838, %v886
    %v888 = vpop.f32.mrb[0].mxu0
    %v889 = vpop.f32.mrb[0].mxu0
    %v890 = vadd.f32 %v841, %v889
    %v891 = vpop.f32.mrb[0].mxu0
    %892 = vmatprep.mubr.bf16.mxu0 0
    %893 = vmatmul.mubr.bf16.gmra.mrb[0].mxu0 %v610
    %v894 = vpop.f32.mrb[0].mxu0
    %v895 = vadd.f32 %v846, %v894
    %v896 = vpop.f32.mrb[0].mxu0
    %v897 = vpop.f32.mrb[0].mxu0
    %v898 = vadd.f32 %v849, %v897
    %v899 = vpop.f32.mrb[0].mxu0
    %900 = vdwg.mxu0
    %v901 = vadd.f32 %v887, %v890
    %v902 = vadd.f32 %v901, %v895
    %v903 = vadd.f32 %v902, %v898
    %v904 = vrot.slane %v903, 4
    %v905 = vadd.f32 %v903, %v904
    %v906 = vrot.slane %v905, 2
    %v907 = vadd.f32 %v905, %v906
    %v908 = vrot.slane %v907, 1
    %v909 = vadd.f32 %v907, %v908
    %v910 = vmul.f32 %v887, %v887
    %v911 = vmul.f32 %v890, %v890
    %v912 = vmul.f32 %v895, %v895
    %v913 = vmul.f32 %v898, %v898
    %v914 = vadd.f32 %v910, %v911
    %v915 = vadd.f32 %v914, %v912
    %v916 = vadd.f32 %v915, %v913
    %v917 = vrot.slane %v916, 4
    %v918 = vadd.f32 %v916, %v917
    %v919 = vrot.slane %v918, 2
    %v920 = vadd.f32 %v918, %v919
    %v921 = vrot.slane %v920, 1
    %v922 = vadd.f32 %v920, %v921
    %v923 = vsel %vm444, %v909, %v922
    %v924 = vld [vmem:[#allocation12] sm:$0xff]
    %v925 = vld [vmem:[#allocation12 + $0x8] sm:$0xff]
    %v926 = vld [vmem:[#allocation12 + $0x10] sm:$0xff]
    %v927 = vld [vmem:[#allocation12 + $0x18] sm:$0xff]
    %v928 = vld [vmem:[#allocation12 + $0x20] sm:$0xff]
    %v929 = vld [vmem:[#allocation12 + $0x28] sm:$0xff]
    %v930 = vld [vmem:[#allocation12 + $0x30] sm:$0xff]
    %v931 = vld [vmem:[#allocation12 + $0x38] sm:$0xff]
    %v932 = vld [vmem:[#allocation12 + $0x40] sm:$0xff]
    %v933 = vld [vmem:[#allocation12 + $0x48] sm:$0xff]
    %v934 = vld [vmem:[#allocation12 + $0x50] sm:$0xff]
    %v935 = vld [vmem:[#allocation12 + $0x58] sm:$0xff]
    %v936 = vld [vmem:[#allocation12 + $0x60] sm:$0xff]
    %v937 = vld [vmem:[#allocation12 + $0x68] sm:$0xff]
    %v938 = vld [vmem:[#allocation12 + $0x70] sm:$0xff]
    %v939 = vld [vmem:[#allocation12 + $0x78] sm:$0xff]
    %940 = vmatprep.subr.mxu0 0.0
    %941 = vmatpush1.msra.mxu0 %v924
    %942 = vmatprep.subr.mxu0 0.0
    %943 = vmatpush1.msra.mxu0 %v925
    %944 = vmatprep.subr.mxu0 0.0
    %945 = vmatpush1.msra.mxu0 %v926
    %946 = vmatprep.subr.mxu0 0.0
    %947 = vmatpush1.msra.mxu0 %v927
    %948 = vmatprep.subr.mxu0 0.0
    %949 = vmatpush1.msra.mxu0 %v928
    %950 = vmatprep.subr.mxu0 0.0
    %951 = vmatpush1.msra.mxu0 %v929
    %952 = vmatprep.subr.mxu0 0.0
    %953 = vmatpush1.msra.mxu0 %v930
    %954 = vmatprep.subr.mxu0 0.0
    %955 = vmatpush1.msra.mxu0 %v931
    %956 = vmatprep.subr.mxu0 0.0
    %957 = vmatpush1.msra.mxu0 %v932
    %958 = vmatprep.subr.mxu0 0.0
    %959 = vmatpush1.msra.mxu0 %v933
    %960 = vmatprep.subr.mxu0 0.0
    %961 = vmatpush1.msra.mxu0 %v934
    %962 = vmatprep.subr.mxu0 0.0
    %963 = vmatpush1.msra.mxu0 %v935
    %964 = vmatprep.subr.mxu0 0.0
    %965 = vmatpush1.msra.mxu0 %v936
    %966 = vmatprep.subr.mxu0 0.0
    %967 = vmatpush1.msra.mxu0 %v937
    %968 = vmatprep.subr.mxu0 0.0
    %969 = vmatpush1.msra.mxu0 %v938
    %970 = vmatprep.subr.mxu0 0.0
    %971 = vmatpush1.msra.mxu0 %v939
    %972 = vmatprep.subr.mxu0 0.0
    %973 = vmatpush1.msra.mxu0 0.0
    %974 = vmatprep.subr.mxu0 0.0
    %975 = vmatpush1.msra.mxu0 0.0
    %976 = vmatprep.subr.mxu0 0.0
    %977 = vmatpush1.msra.mxu0 0.0
    %978 = vmatprep.subr.mxu0 0.0
    %979 = vmatpush1.msra.mxu0 0.0
    %980 = vmatprep.subr.mxu0 0.0
    %981 = vmatpush1.msra.mxu0 0.0
    %982 = vmatprep.subr.mxu0 0.0
    %983 = vmatpush1.msra.mxu0 0.0
    %984 = vmatprep.subr.mxu0 0.0
    %985 = vmatpush1.msra.mxu0 0.0
    %986 = vmatprep.subr.mxu0 0.0
    %987 = vmatpush1.msra.mxu0 0.0
    %988 = vmatprep.subr.mxu0 0.0
    %989 = vmatpush1.msra.mxu0 0.0
    %990 = vmatprep.subr.mxu0 0.0
    %991 = vmatpush1.msra.mxu0 0.0
    %992 = vmatprep.subr.mxu0 0.0
    %993 = vmatpush1.msra.mxu0 0.0
    %994 = vmatprep.subr.mxu0 0.0
    %995 = vmatpush1.msra.mxu0 0.0
    %996 = vmatprep.subr.mxu0 0.0
    %997 = vmatpush1.msra.mxu0 0.0
    %998 = vmatprep.subr.mxu0 0.0
    %999 = vmatpush1.msra.mxu0 0.0
    %1000 = vmatprep.subr.mxu0 0.0
    %1001 = vmatpush1.msra.mxu0 0.0
    %1002 = vmatprep.subr.mxu0 0.0
    %1003 = vmatpush1.msra.mxu0 0.0
    %1004 = vmatprep.mubr.f32.mxu0 0.0
    %1005 = vmatmul.mubr.f32.gmra.mrb[0].mxu0 %v923
    %v1006 = vpop.f32.mrb[0].mxu0
    %v1007 = vadd.f32 0.0, %v1006
    %v1008 = vpop.f32.mrb[0].mxu0
    %1009 = vdwg.mxu0
    %v1010 = vmul.f32 %v1007, %v1007
    %v1012 = vrot.slane %v1010, 7
    %v1014 = vsub.f32 %v1007, %v1012
    %v1015 = vadd.f32 %v1014, 1e-05
    %v1016 = vrsqrt.pop %v1015
    %v1017 = vld [vmem:[%s6] sm:$0x1]
    %v1020 = vunpack.c.l.s4 1966171168
    %v1021 = vunpack.c.0.s8 %v1020
    %v1022 = vlaneseq
    %v1023 = vshrl.u32 %v1022, 7
    %v1024 = vsub.s32 %v1021, %v1023
    %v1025 = vrot.slane %v1016, %v1024
    %v1026 = vcombine.high %v1025, %v1025
    %v1028 = vunpack.c.l.s4 1966171168
    %v1029 = vunpack.c.0.s8 %v1028
    %v1030 = vlaneseq
    %v1031 = vshrl.u32 %v1030, 7
    %v1032 = vsub.s32 %v1029, %v1031
    %v1033 = vrot.slane %v1026, %v1032
    %v1035 = vmul.f32 %v1017, %v1033
    %v1036 = vld [vmem:[%s7] sm:$0x1]
    %v1037 = vmul.f32 %v1007, %v1035
    %v1038 = vsub.f32 %v1036, %v1037
    %v1040 = vlaneseq
    %v1041 = vshrl.u32 %v1040, 7
    %v1042 = vsub.s32 0, %v1041
    %v1043 = vrot.slane %v1035, %v1042
    %v1045 = vmul.f32 %v887, %v1043
    %v1046 = vmul.f32 %v890, %v1043
    %v1047 = vmul.f32 %v895, %v1043
    %v1048 = vmul.f32 %v898, %v1043
    %v1050 = vlaneseq
    %v1051 = vshrl.u32 %v1050, 7
    %v1052 = vsub.s32 0, %v1051
    %v1053 = vrot.slane %v1038, %v1052
    %v1055 = vadd.f32 %v1045, %v1053
    %v1056 = vadd.f32 %v1046, %v1053
    %v1057 = vadd.f32 %v1047, %v1053
    %v1058 = vadd.f32 %v1048, %v1053
    %v1059 = vmax.f32 %v1055, 0.0
    %v1060 = vmax.f32 %v1056, 0.0
    %v1061 = vmax.f32 %v1057, 0.0
    %v1062 = vmax.f32 %v1058, 0.0
    %1063 = vst [vmem:[#allocation13] sm:$0xff] %v1059
    %1064 = vst [vmem:[#allocation13 + $0x8] sm:$0xff] %v1060
    %1065 = vst [vmem:[#allocation13 + $0x10] sm:$0xff] %v1061
    %1066 = vst [vmem:[#allocation13 + $0x18] sm:$0xff] %v1062
    // Predicated region
    $region58: #{tpu_custom_call.1} parent=1 // pred_check
      _
    $region59: #{tpu_custom_call.1} parent=1 // pred_check_branch
      %1068 = sbr.rel (0) target = $region61
    $region60: #{tpu_custom_call.1} parent=1 // pred_region
      %s1070 = ssub.s32 512, 512
      %1071 = vsyncadd [#allocation6], %s1070
      %s1072 = sshll.u32 [#allocation13], 4
      %s1073 = int_to_ptr.vmem [resolvable:$true] %s1072
      %1078 = dma.vmem_to_hbm [thread:$0]  %s1073, 512, %s9, [#allocation6], 128, 128, 8
    $region61: #{tpu_custom_call.1} parent=1 // pred_fallthru
      _
    // Predicated region
    $region62: #{tpu_custom_call.1} parent=1 // pred_check
      _
    $region63: #{tpu_custom_call.1} parent=1 // pred_check_branch
      %1080 = sbr.rel (0) target = $region65
    $region64: #{tpu_custom_call.1} parent=1 // pred_region
      %1081 = dma.done [#allocation6], 512
    $region65: #{tpu_custom_call.1} parent=1 // pred_fallthru
      _
    %1082 = vsyncpa [#allocation5], 1
    %1083 = vsyncpa [#allocation8], 1
    %1084 = vsyncpa [#allocation11], 1
    %1085 = vsyncpa [#allocation6], 1

</llo_original>
